<compile_context>
chip_gen: v5e
topology: v5e:2x2
jax: 0.10.0
libtpu: 0.0.40
codegen_flags: <defaults>
</compile_context>

<pallas_src>
import functools

import jax
import jax.numpy as jnp
from jax import lax
from jax.experimental import pallas as pl
from jax.experimental.pallas import tpu as pltpu

_LN_EPS = 1e-5        # PyTorch nn.LayerNorm default
_NEG_SLOPE = 0.01     # nn.LeakyReLU default
_BF16 = jnp.bfloat16
_VMEM_LIMIT = 64 * 1024 * 1024   # explicit scoped-VMEM limit (fits v5e/v6e/v7x)


# ----------------------------- small helpers ----------------------------------------

def _round_up(x, m):
    return ((x + m - 1) // m) * m


def _pick_row_tile(rows, cap=256):
    """Largest multiple of 8 that divides `rows` and is <= cap."""
    best = 8
    t = 8
    while t <= min(rows, cap):
        if rows % t == 0:
            best = t
        t += 8
    return best


def _pick_hidden_tile(mlp, cap=2048):
    """Hidden-dim tile for the MLP kernel (multiple of 128 dividing mlp)."""
    half = mlp // 2
    if mlp < 256 or half % 128 != 0:
        return mlp
    return min(cap, half)


def _cparams(*sem):
    return pltpu.CompilerParams(dimension_semantics=sem,
                                vmem_limit_bytes=_VMEM_LIMIT)


def _wspec(shape):
    # Grid-invariant operand: constant index_map + single buffer (no wasted
    # double-buffering of weights that never change across the grid).
    nd = len(shape)
    return pl.BlockSpec(shape, lambda *_: (0,) * nd,
                        pipeline_mode=pl.Buffered(buffer_count=1))


# ----------------------------- in-kernel helpers -------------------------------------

def _ln(x, g, b, eps=_LN_EPS):
    mean = jnp.mean(x, axis=-1, keepdims=True)
    var = jnp.mean(jnp.square(x - mean), axis=-1, keepdims=True)
    return (x - mean) * lax.rsqrt(var + eps) * g + b


def _bdot(a, b):
    # bf16 x bf16 MXU matmul with f32 accumulation.
    return jnp.dot(a.astype(_BF16), b.astype(_BF16), preferred_element_type=jnp.float32)


def _leaky(y):
    return jnp.where(y >= 0.0, y, _NEG_SLOPE * y)


# ----------------------------- Pallas kernels ----------------------------------------

def _patch_embed_kernel(p_ref, w_ref, o_ref):
    # conv1 (stride == kernel, bias=False) lowered to a matmul over flattened patches.
    o_ref[...] = _bdot(p_ref[...], w_ref[...])


def _embed_ln_kernel(x_ref, pos_ref, g_ref, b_ref, o_ref):
    # (cls + patch tokens) + positional embedding, then ln_pre.  One HBM pass.
    o_ref[...] = _ln(x_ref[...] + pos_ref[...], g_ref[...], b_ref[...])


def _attn_block_kernel(x_ref, g_ref, b_ref, wqkv_ref, bqkv_ref, wout_ref, bout_ref,
                       o_ref, qkv_ref, attn_ref, *, heads, hd, scale, s_valid):
    # x = x + out_proj(MHA(ln_1(x)))  for one batch element (full padded sequence).
    x = x_ref[...]                                          # (S_pad, W) f32
    h = _ln(x, g_ref[...], b_ref[...])
    # biased QKV stored bf16 in VMEM scratch (halves the largest live temporary).
    qkv_ref[...] = (_bdot(h, wqkv_ref[...]) + bqkv_ref[...]).astype(_BF16)

    s_pad = x.shape[0]
    width = heads * hd
    if s_valid < s_pad:                                     # mask padded key columns
        ids = lax.broadcasted_iota(jnp.int32, (1, s_pad), 1)
        neg = jnp.where(ids < s_valid, 0.0, -1e30).astype(jnp.float32)
    else:
        neg = None

    # TODO(synk): at real CLIP-L (heads=16) switch this static unroll to
    # lax.fori_loop(..., unroll=2) with pl.ds head offsets to cap code size / vregs.
    for hh in range(heads):
        lo = hh * hd
        q = qkv_ref[:, lo:lo + hd]                          # bf16 slices of scratch
        k = qkv_ref[:, width + lo:width + lo + hd]
        v = qkv_ref[:, 2 * width + lo:2 * width + lo + hd]
        s = lax.dot_general(q, k, (((1,), (1,)), ((), ())),
                            preferred_element_type=jnp.float32) * scale
        if neg is not None:
            s = s + neg
        m = jnp.max(s, axis=-1, keepdims=True)
        p = jnp.exp(s - m)
        p = p * pl.reciprocal(jnp.sum(p, axis=-1, keepdims=True), approx=True)
        o_h = jnp.dot(p.astype(_BF16), v, preferred_element_type=jnp.float32)
        attn_ref[:, lo:lo + hd] = o_h.astype(_BF16)         # head result at lane offset

    # single full-K output projection + fused residual + bias
    o_ref[...] = x + jnp.dot(attn_ref[...], wout_ref[...],
                             preferred_element_type=jnp.float32) + bout_ref[...]


def _mlp_block_kernel(x_ref, g_ref, b_ref, wfc_ref, bfc_ref, wproj_ref, bproj_ref,
                      o_ref, xln_ref, acc_ref):
    # x = x + proj(gelu(fc(ln_2(x)))), tiled over the hidden dimension (grid axis 1).
    h = pl.program_id(1)

    @pl.when(h == 0)
    def _():
        xln_ref[...] = _ln(x_ref[...], g_ref[...], b_ref[...]).astype(_BF16)
        acc_ref[...] = jnp.zeros_like(acc_ref)

    act = jnp.dot(xln_ref[...], wfc_ref[...],
                  preferred_element_type=jnp.float32) + bfc_ref[...]
    # TODO(synk): PyTorch nn.GELU defaults to exact erf; tanh approximation used here.
    act = jax.nn.gelu(act, approximate=True)
    acc_ref[...] += jnp.dot(act.astype(_BF16), wproj_ref[...],
                            preferred_element_type=jnp.float32)

    @pl.when(h == pl.num_programs(1) - 1)
    def _():
        o_ref[...] = x_ref[...] + acc_ref[...] + bproj_ref[...]


def _adapter_block_kernel(x_ref, sw1_ref, sw2_ref, dw1_ref, dw2_ref,
                          o_ref, smed_ref, dmed_ref):
    # seg/det adapters (fc1+LeakyReLU, fc2+LeakyReLU) + 0.8/0.1/0.1 mix, fully fused.
    x = x_ref[...]
    s_med = _leaky(_bdot(x, sw1_ref[...]))
    s_out = _leaky(_bdot(s_med, sw2_ref[...]))
    d_med = _leaky(_bdot(x, dw1_ref[...]))
    d_out = _leaky(_bdot(d_med, dw2_ref[...]))
    smed_ref[...] = s_med
    dmed_ref[...] = d_med
    o_ref[...] = 0.8 * x + 0.1 * s_out + 0.1 * d_out


# ----------------------------- kernel wrappers ----------------------------------------

def pallas_patch_embed(patches, w):
    M, K = patches.shape
    width = w.shape[1]
    tm = min(256, _round_up(M, 8))
    m_pad = _round_up(M, tm)
    if m_pad != M:
        patches = jnp.pad(patches, ((0, m_pad - M), (0, 0)))
    out = pl.pallas_call(
        _patch_embed_kernel,
        out_shape=jax.ShapeDtypeStruct((m_pad, width), jnp.float32),
        grid=(m_pad // tm,),
        in_specs=[pl.BlockSpec((tm, K), lambda i: (i, 0)), _wspec((K, width))],
        out_specs=pl.BlockSpec((tm, width), lambda i: (i, 0)),
        compiler_params=_cparams("parallel"),
    )(patches, w)
    return out[:M]


def pallas_embed_ln(xr, pos_pad, g, b, *, batch, s_pad):
    R, W = xr.shape
    return pl.pallas_call(
        _embed_ln_kernel,
        out_shape=jax.ShapeDtypeStruct((R, W), jnp.float32),
        grid=(batch,),
        in_specs=[pl.BlockSpec((s_pad, W), lambda i: (i, 0)),
                  _wspec((s_pad, W)), _wspec((1, W)), _wspec((1, W))],
        out_specs=pl.BlockSpec((s_pad, W), lambda i: (i, 0)),
        compiler_params=_cparams("parallel"),
    )(xr, pos_pad, g, b)


def pallas_attn_block(xr, blk, *, batch, s_pad, s_valid, heads):
    R, W = xr.shape
    hd = W // heads
    kernel = functools.partial(_attn_block_kernel, heads=heads, hd=hd,
                               scale=1.0 / (hd ** 0.5), s_valid=s_valid)
    # NOTE(v7x): with tiny batches the (B,) "parallel" axis cannot feed both TCs;
    # shard head groups / weight tiles across cores when scaling up.
    return pl.pallas_call(
        kernel,
        out_shape=jax.ShapeDtypeStruct((R, W), jnp.float32),
        grid=(batch,),
        in_specs=[
            pl.BlockSpec((s_pad, W), lambda b: (b, 0)),
            _wspec((1, W)), _wspec((1, W)),            # ln_1 gamma / beta
            _wspec((W, 3 * W)), _wspec((1, 3 * W)),    # in_proj
            _wspec((W, W)), _wspec((1, W)),            # out_proj
        ],
        out_specs=pl.BlockSpec((s_pad, W), lambda b: (b, 0)),
        scratch_shapes=[pltpu.VMEM((s_pad, 3 * W), _BF16),   # biased qkv (bf16)
                        pltpu.VMEM((s_pad, W), _BF16)],      # per-head attention out
        compiler_params=_cparams("parallel"),
    )(xr, blk["ln1_g"], blk["ln1_b"], blk["in_proj_w"], blk["in_proj_b"],
      blk["out_proj_w"], blk["out_proj_b"])


def pallas_mlp_block(xr, blk):
    R, W = xr.shape
    mlp = blk["fc_w"].shape[1]
    t_r = _pick_row_tile(R)
    t_h = _pick_hidden_tile(mlp)
    return pl.pallas_call(
        _mlp_block_kernel,
        out_shape=jax.ShapeDtypeStruct((R, W), jnp.float32),
        grid=(R // t_r, mlp // t_h),
        in_specs=[
            pl.BlockSpec((t_r, W), lambda r, h: (r, 0)),
            _wspec((1, W)), _wspec((1, W)),                       # ln_2 gamma / beta
            pl.BlockSpec((W, t_h), lambda r, h: (0, h)),          # c_fc weight tile
            pl.BlockSpec((1, t_h), lambda r, h: (0, h)),          # c_fc bias tile
            pl.BlockSpec((t_h, W), lambda r, h: (h, 0)),          # c_proj weight tile
            _wspec((1, W)),                                       # c_proj bias
        ],
        out_specs=pl.BlockSpec((t_r, W), lambda r, h: (r, 0)),
        scratch_shapes=[pltpu.VMEM((t_r, W), _BF16),              # ln_2(x) cached bf16
                        pltpu.VMEM((t_r, W), jnp.float32)],       # f32 accumulator
        compiler_params=_cparams("parallel", "arbitrary"),
    )(xr, blk["ln2_g"], blk["ln2_b"], blk["fc_w"], blk["fc_b"],
      blk["proj_w"], blk["proj_b"])


def pallas_adapter_block(xr, seg, det):
    R, W = xr.shape
    bneck = seg["fc1_w"].shape[1]
    t_r = _pick_row_tile(R)
    row_spec = pl.BlockSpec((t_r, W), lambda r: (r, 0))
    med_spec = pl.BlockSpec((t_r, bneck), lambda r: (r, 0))
    out, s_med, d_med = pl.pallas_call(
        _adapter_block_kernel,
        out_shape=(jax.ShapeDtypeStruct((R, W), jnp.float32),
                   jax.ShapeDtypeStruct((R, bneck), jnp.float32),
                   jax.ShapeDtypeStruct((R, bneck), jnp.float32)),
        grid=(R // t_r,),
        in_specs=[
            row_spec,
            _wspec((W, bneck)), _wspec((bneck, W)),   # seg adapter fc1 / fc2 (bias=False)
            _wspec((W, bneck)), _wspec((bneck, W)),   # det adapter fc1 / fc2 (bias=False)
        ],
        out_specs=(row_spec, med_spec, med_spec),
        compiler_params=_cparams("parallel"),
    )(xr, seg["fc1_w"], seg["fc2_w"], det["fc1_w"], det["fc2_w"])
    return out, s_med, d_med


# ----------------------------- parameters ---------------------------------------------

def _xavier(key, fan_in, fan_out, dtype=jnp.float32):
    lim = (6.0 / (fan_in + fan_out)) ** 0.5
    return jax.random.uniform(key, (fan_in, fan_out), jnp.float32, -lim, lim).astype(dtype)


def init_params(key, cfg):
    width = cfg["width"]
    patch = cfg["patch"]
    cin = cfg["in_chans"]
    mlp = cfg["mlp_ratio"] * width
    grid = cfg["image_size"] // patch
    seq = grid * grid + 1
    keys = iter(jax.random.split(key, 256))
    nk = lambda: next(keys)

    def ln_pair():
        return (jnp.ones((1, width), jnp.float32) + 0.1 * jax.random.normal(nk(), (1, width)),
                0.1 * jax.random.normal(nk(), (1, width)))

    ln_pre_g, ln_pre_b = ln_pair()
    params = {
        "patch_size": patch,
        # TODO(synk): when loading real CLIP weights, reshape PyTorch's conv1 weight
        # (out, in, kh, kw) into (in*kh*kw, out) with exactly the (c, ph, pw) flatten order.
        "conv1_w": _xavier(nk(), cin * patch * patch, width, _BF16),
        "class_embedding": 0.02 * jax.random.normal(nk(), (width,), jnp.float32),
        "positional_embedding": 0.01 * jax.random.normal(nk(), (seq, width), jnp.float32),
        "ln_pre_g": ln_pre_g,
        "ln_pre_b": ln_pre_b,
        "blocks": [],
        "seg_adapters": [],
        "det_adapters": [],
    }
    for _ in range(cfg["num_layers"]):
        ln1_g, ln1_b = ln_pair()
        ln2_g, ln2_b = ln_pair()
        params["blocks"].append({
            "ln1_g": ln1_g, "ln1_b": ln1_b,
            "in_proj_w": _xavier(nk(), width, 3 * width, _BF16),
            "in_proj_b": 0.01 * jax.random.normal(nk(), (1, 3 * width), jnp.float32),
            "out_proj_w": _xavier(nk(), width, width, _BF16),
            "out_proj_b": 0.01 * jax.random.normal(nk(), (1, width), jnp.float32),
            "ln2_g": ln2_g, "ln2_b": ln2_b,
            "fc_w": _xavier(nk(), width, mlp, _BF16),
            "fc_b": 0.01 * jax.random.normal(nk(), (1, mlp), jnp.float32),
            "proj_w": _xavier(nk(), mlp, width, _BF16),
            "proj_b": 0.01 * jax.random.normal(nk(), (1, width), jnp.float32),
        })
    for _ in cfg["features"]:
        for name in ("seg_adapters", "det_adapters"):
            params[name].append({
                "fc1_w": _xavier(nk(), width, cfg["bottleneck"], _BF16),   # bias=False
                "fc2_w": _xavier(nk(), cfg["bottleneck"], width, _BF16),   # bias=False
            })
    return params


# ----------------------------- forward --------------------------------------------------

def clip_inplanted_forward(params, x, *, features, num_layers, heads):
    B, cin, H, W = x.shape
    P = params["patch_size"]
    width = params["positional_embedding"].shape[1]
    hp, wp = H // P, W // P
    S = hp * wp + 1
    S_pad = _round_up(S, 8)

    # conv1 (stride == kernel, no bias) -> matmul over flattened (c, ph, pw) patches
    patches = (x.reshape(B, cin, hp, P, wp, P)
                 .transpose(0, 2, 4, 1, 3, 5)
                 .reshape(B * hp * wp, cin * P * P))
    tok = pallas_patch_embed(patches, params["conv1_w"]).reshape(B, hp * wp, width)

    # class token, pad sequence to a multiple of 8, flatten rows to (B*S_pad, width).
    cls = jnp.broadcast_to(params["class_embedding"][None, None, :].astype(jnp.float32),
                           (B, 1, width))
    xt = jnp.concatenate([cls, tok], axis=1)                        # (B, S, width)
    xt = jnp.pad(xt, ((0, 0), (0, S_pad - S), (0, 0)))              # (B, S_pad, width)
    xr = xt.reshape(B * S_pad, width)                               # flattened residual

    pos_pad = jnp.pad(params["positional_embedding"], ((0, S_pad - S), (0, 0)))
    # patch_dropout: identity (eval / prob=0).  Fused (+pos, ln_pre) kernel.
    xr = pallas_embed_ln(xr, pos_pad, params["ln_pre_g"], params["ln_pre_b"],
                         batch=B, s_pad=S_pad)

    seg_tokens, det_tokens = [], []
    for i in range(num_layers):
        blk = params["blocks"][i]
        xr = pallas_attn_block(xr, blk, batch=B, s_pad=S_pad, s_valid=S, heads=heads)
        xr = pallas_mlp_block(xr, blk)
        if (i + 1) in features:
            ai = features.index(i + 1)
            xr, s_med, d_med = pallas_adapter_block(
                xr, params["seg_adapters"][ai], params["det_adapters"][ai])
            bneck = s_med.shape[-1]
            seg_tokens.append(s_med.reshape(B, S_pad, bneck)[:, :S, :])
            det_tokens.append(d_med.reshape(B, S_pad, bneck)[:, :S, :])

    # Tokens are batch-first, matching the reference's final permute(1, 0, 2).
    # The reference forward literally returns 0 as its first output (no pooled feature).
    # TODO(synk): the modified resblocks also return attention weights; they are unused
    # by the reference forward and are not materialized here.
    return 0, seg_tokens, det_tokens


# ----------------------------- main -----------------------------------------------------

if __name__ == "__main__":
    cfg = dict(
        width=256,          # scaled-down stand-in for CLIP ViT-L width 1024
        heads=2,            # -> head_dim = 128 (lane-dense)
        patch=4,
        image_size=16,      # -> 4x4 = 16 patches, seq = 17 (padded to 24)
        in_chans=3,
        mlp_ratio=4,
        bottleneck=128,     # lane-dense stand-in for adapter bottleneck 768
        num_layers=4,       # stand-in for 24 transformer layers
        features=[2, 4],    # adapter layers (1-indexed, like `i + 1 in self.features`)
    )
    key = jax.random.PRNGKey(0)
    pkey, xkey = jax.random.split(key)
    params = init_params(pkey, cfg)
    x = jax.random.normal(xkey, (2, cfg["in_chans"], cfg["image_size"], cfg["image_size"]),
                          jnp.float32)

    _, seg_tokens, det_tokens = clip_inplanted_forward(
        params, x, features=cfg["features"], num_layers=cfg["num_layers"], heads=cfg["heads"])

    for t in seg_tokens + det_tokens:
        jax.block_until_ready(t)

    assert len(seg_tokens) == len(cfg["features"])
    assert len(det_tokens) == len(cfg["features"])
    assert seg_tokens[0].shape == (2, 17, cfg["bottleneck"])
    assert det_tokens[-1].shape == (2, 17, cfg["bottleneck"])
    assert all(bool(jnp.all(jnp.isfinite(t))) for t in seg_tokens + det_tokens)
    print("KERNEL_OK")
</pallas_src>

<mosaic_0001>
module attributes {stable_mosaic.version = 11 : i64} {
  func.func @_patch_embed_kernel(%arg0: i32, %arg1: memref<32x48xf32, #tpu.memory_space<vmem>>, %arg2: memref<48x256xbf16, #tpu.memory_space<vmem>>, %arg3: memref<32x256xf32, #tpu.memory_space<vmem>>) attributes {dimension_semantics = [#tpu.dimension_semantics<parallel>], iteration_bounds = array<i64: 1>, scalar_prefetch = 0 : i64, scratch_operands = 0 : i64, tpu.core_type = #tpu.core_type<tc>, window_params = [{transform_indices = @transform_0, window_bounds = array<i64: 32, 48>}, {pipeline_mode = #tpu.pipeline_mode<synchronous>, transform_indices = @transform_1, window_bounds = array<i64: 48, 256>}, {transform_indices = @transform_2, window_bounds = array<i64: 32, 256>}]} {
    %c0 = arith.constant 0 : index
    %c0_0 = arith.constant 0 : index
    %0 = vector.load %arg1[%c0, %c0_0] : memref<32x48xf32, #tpu.memory_space<vmem>>, vector<32x48xf32>
    %c0_1 = arith.constant 0 : index
    %c0_2 = arith.constant 0 : index
    %1 = vector.load %arg2[%c0_1, %c0_2] : memref<48x256xbf16, #tpu.memory_space<vmem>>, vector<48x256xbf16>
    %2 = arith.truncf %0 : vector<32x48xf32> to vector<32x48xbf16>
    %cst = arith.constant dense<0.000000e+00> : vector<32x256xf32>
    %3 = tpu.matmul %2, %1, %cst {dimension_numbers = #tpu.dot_dimension_numbers<[1], [0], [0], [1], [0, 0, 1, 1], [], []>} : vector<32x48xbf16>, vector<48x256xbf16>, vector<32x256xf32> -> vector<32x256xf32>
    %c0_3 = arith.constant 0 : index
    %c0_4 = arith.constant 0 : index
    %4 = vector.load %arg3[%c0_3, %c0_4] : memref<32x256xf32, #tpu.memory_space<vmem>>, vector<32x256xf32>
    tpu.vector_store %arg3[%c0_3, %c0_4], %3 {strides = array<i32>} : memref<32x256xf32, #tpu.memory_space<vmem>>, vector<32x256xf32>,
    return
  }
  func.func @transform_0(%arg0: i32) -> (i32, i32) {
    %c0_i32 = arith.constant 0 : i32
    %c0_i32_0 = arith.constant 0 : i32
    return %arg0, %c0_i32 : i32, i32
  }
  func.func @transform_1(%arg0: i32) -> (i32, i32) {
    %c0_i32 = arith.constant 0 : i32
    %c0_i32_0 = arith.constant 0 : i32
    %c0_i32_1 = arith.constant 0 : i32
    return %c0_i32, %c0_i32_0 : i32, i32
  }
  func.func @transform_2(%arg0: i32) -> (i32, i32) {
    %c0_i32 = arith.constant 0 : i32
    %c0_i32_0 = arith.constant 0 : i32
    return %arg0, %c0_i32 : i32, i32
  }
}

</mosaic_0001>

<llo_original>
// kernel: tpu_custom_call.1
$region0: #{tpu_custom_call.1}
  #allocation0 [shape = 'u32[]', space=smem, size = 0x4, offset = 0x4, fixed_abs, tag = 'smem constant byte address 0x4 - core index']
  #allocation1 [shape = 'u32[72,128]{1,0:T(1,128)}', space=vmem, size = 0x9000, scoped, tag = 'internal scratch']
  %s0 = inlined_call_operand.hbm [shape: f32[32,48], index: 0, kind: input, shape index: {}]
  %s1 = inlined_call_operand.hbm [shape: bf16[48,256], index: 1, kind: input, shape index: {}]
  %s2 = inlined_call_operand.hbm [shape: f32[32,256], index: 2, kind: output, shape index: {}]
  %s3 = sld [smem:[#allocation0]]
  $region26: #{tpu_custom_call.1} parent=0
    _
  %s5 = ssub.s32 1, %s3
  %s6 = scalar_select 0, %s5, %s3
  $region1: #{tpu_custom_call.1} parent=0
    #allocation2 [shape = 'u8[16384]{0}', space=vmem, size = 0x4000, scoped, tag = 'input window, operand 0, single buffered']
    #allocation3 [shape = 's32[1]{0}', space=sflag, size = 0x4, scoped, tag = 'scoped memory for tpu_custom_call.1']
    #allocation4 [shape = 's32[1]{0}', space=sflag, size = 0x4, scoped, tag = 'scoped memory for tpu_custom_call.1']
    #allocation5 [shape = 'u8[24576]{0}', space=vmem, size = 0x6000, scoped, tag = 'input window, operand 1, single buffered']
    #allocation6 [shape = 's32[1]{0}', space=sflag, size = 0x4, scoped, tag = 'scoped memory for tpu_custom_call.1']
    #allocation7 [shape = 'u8[32768]{0}', space=vmem, size = 0x8000, scoped, tag = 'output window, operand 0, single buffered']
    %7 = vsyncpa [#allocation3], 0
    %8 = vsyncpa [#allocation6], 0
    %9 = vsyncpa [#allocation4], 0
    // Predicated region
    $region2: #{tpu_custom_call.1} parent=1 // pred_check
      _
    $region3: #{tpu_custom_call.1} parent=1 // pred_check_branch
      %11 = sbr.rel (0) target = $region5
    $region4: #{tpu_custom_call.1} parent=1 // pred_region
      %13 = vsyncadd [#allocation3], 0
      %s14 = sshll.u32 %s0, 4
      %s15 = int_to_ptr.hbm [resolvable:$true] %s14
      %s16 = sshll.u32 [#allocation2], 4
      %s17 = int_to_ptr.vmem [resolvable:$true] %s16
      %22 = dma.hbm_to_vmem [thread:$0]  %s15, 512, %s17, [#allocation3], 128, 128, 8
    $region5: #{tpu_custom_call.1} parent=1 // pred_fallthru
      _
    // Predicated region
    $region6: #{tpu_custom_call.1} parent=1 // pred_check
      _
    $region7: #{tpu_custom_call.1} parent=1 // pred_check_branch
      %24 = sbr.rel (0) target = $region9
    $region8: #{tpu_custom_call.1} parent=1 // pred_region
      %26 = vsyncadd [#allocation6], 0
      %s27 = sshll.u32 %s1, 4
      %s28 = int_to_ptr.hbm [resolvable:$true] %s27
      %s29 = sshll.u32 [#allocation5], 4
      %s30 = int_to_ptr.vmem [resolvable:$true] %s29
      %35 = dma.hbm_to_vmem [thread:$0]  %s28, 768, %s30, [#allocation6], 128, 128, 8
    $region9: #{tpu_custom_call.1} parent=1 // pred_fallthru
      _
    // Predicated region
    $region10: #{tpu_custom_call.1} parent=1 // pred_check
      _
    $region11: #{tpu_custom_call.1} parent=1 // pred_check_branch
      %37 = sbr.rel (0) target = $region13
    $region12: #{tpu_custom_call.1} parent=1 // pred_region
      %39 = dma.done [#allocation3], 512
    $region13: #{tpu_custom_call.1} parent=1 // pred_fallthru
      _
    // Predicated region
    $region14: #{tpu_custom_call.1} parent=1 // pred_check
      _
    $region15: #{tpu_custom_call.1} parent=1 // pred_check_branch
      %41 = sbr.rel (0) target = $region17
    $region16: #{tpu_custom_call.1} parent=1 // pred_region
      %43 = dma.done [#allocation6], 768
    $region17: #{tpu_custom_call.1} parent=1 // pred_fallthru
      _
    %v45 = vld [vmem:[#allocation2] sm:$0xff]
    %v46 = vld [vmem:[#allocation2 + $0x8] sm:$0xff]
    %v47 = vld [vmem:[#allocation2 + $0x10] sm:$0xff]
    %v48 = vld [vmem:[#allocation2 + $0x18] sm:$0xff]
    %v49 = vld [vmem:[#allocation5] sm:$0xff]
    %v50 = vld [vmem:[#allocation5 + $0x8] sm:$0xff]
    %v51 = vld [vmem:[#allocation5 + $0x10] sm:$0xff]
    %v52 = vld [vmem:[#allocation5 + $0x18] sm:$0xff]
    %v53 = vld [vmem:[#allocation5 + $0x20] sm:$0xff]
    %v54 = vld [vmem:[#allocation5 + $0x28] sm:$0xff]
    %v55 = vpack.c.bf16 %v46, %v45
    %v56 = vpack.c.bf16 %v48, %v47
    %v63 = vunpack.c.l.b16 %v49
    %v64 = vunpack.c.h.b16 %v49
    %v65 = vunpack.c.l.b16 %v50
    %v66 = vunpack.c.h.b16 %v50
    %v67 = vunpack.c.l.b16 %v51
    %v68 = vunpack.c.h.b16 %v51
    %v69 = vunpack.c.l.b16 %v52
    %v70 = vunpack.c.h.b16 %v52
    %v71 = vunpack.c.l.b16 %v53
    %v72 = vunpack.c.h.b16 %v53
    %v73 = vunpack.c.l.b16 %v54
    %v74 = vunpack.c.h.b16 %v54
    %v75 = vpack.c.b16 %v65, %v63
    %v76 = vpack.c.b16 %v66, %v64
    %v77 = vpack.c.b16 %v69, %v67
    %v78 = vpack.c.b16 %v70, %v68
    %v79 = vpack.c.b16 %v73, %v71
    %v80 = vpack.c.b16 %v74, %v72
    %vm87 = vcmask 392192
    %v89 = vsel %vm87, %v55, 0
    %v92 = vsel %vm87, %v56, 0
    %94 = vmatpush.bf16.msra.mxu0 0
    %95 = vmatpush.bf16.msra.mxu0 0
    %96 = vmatpush.bf16.msra.mxu0 0
    %97 = vmatpush.bf16.msra.mxu0 0
    %98 = vmatpush.bf16.msra.mxu0 0
    %99 = vmatpush.bf16.msra.mxu0 %v79
    %100 = vmatpush.bf16.msra.mxu0 %v77
    %101 = vmatpush.bf16.msra.mxu0 %v75
    %102 = vmatmul.bf16.gmra.mxu0 %v89
    %v103 = vpop.f32.mrf.mxu0
    %v104 = vadd.f32 0.0, %v103
    %v105 = vpop.f32.mrf.mxu0
    %v106 = vadd.f32 0.0, %v105
    %107 = vmatmul.bf16.gmra.mxu0 %v92
    %v108 = vpop.f32.mrf.mxu0
    %v109 = vadd.f32 0.0, %v108
    %v110 = vpop.f32.mrf.mxu0
    %v111 = vadd.f32 0.0, %v110
    %112 = vdwg.mxu0
    %113 = vmatpush.bf16.msra.mxu0 0
    %114 = vmatpush.bf16.msra.mxu0 0
    %115 = vmatpush.bf16.msra.mxu0 0
    %116 = vmatpush.bf16.msra.mxu0 0
    %117 = vmatpush.bf16.msra.mxu0 0
    %118 = vmatpush.bf16.msra.mxu0 %v80
    %119 = vmatpush.bf16.msra.mxu0 %v78
    %120 = vmatpush.bf16.msra.mxu0 %v76
    %121 = vmatmul.bf16.gmra.mxu0 %v89
    %v122 = vpop.f32.mrf.mxu0
    %v123 = vadd.f32 0.0, %v122
    %v124 = vpop.f32.mrf.mxu0
    %v125 = vadd.f32 0.0, %v124
    %126 = vmatmul.bf16.gmra.mxu0 %v92
    %v127 = vpop.f32.mrf.mxu0
    %v128 = vadd.f32 0.0, %v127
    %v129 = vpop.f32.mrf.mxu0
    %v130 = vadd.f32 0.0, %v129
    %131 = vdwg.mxu0
    %132 = vst [vmem:[#allocation7] sm:$0xff] %v104
    %133 = vst [vmem:[#allocation7 + $0x8] sm:$0xff] %v123
    %134 = vst [vmem:[#allocation7 + $0x10] sm:$0xff] %v106
    %135 = vst [vmem:[#allocation7 + $0x18] sm:$0xff] %v125
    %136 = vst [vmem:[#allocation7 + $0x20] sm:$0xff] %v109
    %137 = vst [vmem:[#allocation7 + $0x28] sm:$0xff] %v128
    %138 = vst [vmem:[#allocation7 + $0x30] sm:$0xff] %v111
    %139 = vst [vmem:[#allocation7 + $0x38] sm:$0xff] %v130
    // Predicated region
    $region18: #{tpu_custom_call.1} parent=1 // pred_check
      _
    $region19: #{tpu_custom_call.1} parent=1 // pred_check_branch
      %141 = sbr.rel (0) target = $region21
    $region20: #{tpu_custom_call.1} parent=1 // pred_region
      %143 = vsyncadd [#allocation4], 0
      %s144 = sshll.u32 [#allocation7], 4
      %s145 = int_to_ptr.vmem [resolvable:$true] %s144
      %s146 = sshll.u32 %s2, 4
      %s147 = int_to_ptr.hbm [resolvable:$true] %s146
      %152 = dma.vmem_to_hbm [thread:$0]  %s145, 1024, %s147, [#allocation4], 256, 256, 16
    $region21: #{tpu_custom_call.1} parent=1 // pred_fallthru
      _
    // Predicated region
    $region22: #{tpu_custom_call.1} parent=1 // pred_check
      _
    $region23: #{tpu_custom_call.1} parent=1 // pred_check_branch
      %154 = sbr.rel (0) target = $region25
    $region24: #{tpu_custom_call.1} parent=1 // pred_region
      %156 = dma.done [#allocation4], 1024
    $region25: #{tpu_custom_call.1} parent=1 // pred_fallthru
      _
    %157 = vsyncpa [#allocation3], 1
    %158 = vsyncpa [#allocation6], 1
    %159 = vsyncpa [#allocation4], 1

</llo_original>
